<compile_context>
chip_gen: v5e
topology: v5e:2x2
jax: 0.10.0
libtpu: 0.0.40
codegen_flags: <defaults>
</compile_context>

<pallas_src>
import jax
import jax.numpy as jnp
from jax.experimental import pallas as pl
from jax.experimental.pallas import tpu as pltpu


# -------------------------------------------------------------------------
# Fused kernel: GConvGRU cell step + relu + edge gather + hadamard + post-sum
# -------------------------------------------------------------------------
def fused_gconv_gru_link_kernel(xh_ref, h_ref, l_ref, w_ref, bcat_ref, whh_ref,
                                src_ref, dst_ref, wsum_ref, bsum_ref,
                                h_new_ref, score_ref):
    n_nodes, fh = h_ref.shape
    e_pad = src_ref.shape[0]

    xh = xh_ref[...]            # [N, Fi+Fh]   matmul dtype (bf16 by default)
    h = h_ref[...]              # [N, Fh]      f32 (gating path)
    L = l_ref[...]              # [N, N]       matmul dtype
    md = xh.dtype

    # --- one merged L pass: L @ [x | h] ------------------------------------
    lxh = jnp.dot(L, xh, preferred_element_type=jnp.float32)         # [N, Fi+Fh]

    # --- two wide stacked weight matmuls (z|r|h columns) --------------------
    pre = (jnp.dot(xh, w_ref[0], preferred_element_type=jnp.float32)
           + jnp.dot(lxh.astype(md), w_ref[1], preferred_element_type=jnp.float32)
           + bcat_ref[...])                                           # [N, 3*Fh]

    z = jax.nn.sigmoid(pre[:, :fh])
    r = jax.nn.sigmoid(pre[:, fh:2 * fh])

    # --- candidate gate (second and last L pass) ----------------------------
    hr = h * r                                                        # f32
    hr_m = hr.astype(md)
    lhr = jnp.dot(L, hr_m, preferred_element_type=jnp.float32)        # [N, Fh]
    cand = (pre[:, 2 * fh:]
            + jnp.dot(hr_m, whh_ref[0], preferred_element_type=jnp.float32)
            + jnp.dot(lhr.astype(md), whh_ref[1],
                      preferred_element_type=jnp.float32))
    h_tilde = jnp.tanh(cand)

    h_new = z * h + (1.0 - z) * h_tilde                               # [N, Fh] f32
    h_new_ref[...] = h_new

    # --- fused link scoring (gather via one-hot matmul, all in VMEM) --------
    h_relu = jnp.maximum(h_new, 0.0)
    node_iota = jax.lax.broadcasted_iota(jnp.int32, (e_pad, n_nodes), 1)
    a_src = (node_iota == src_ref[...]).astype(jnp.float32)           # [E_pad, N]
    a_dst = (node_iota == dst_ref[...]).astype(jnp.float32)           # [E_pad, N]
    hs = jnp.dot(a_src, h_relu, preferred_element_type=jnp.float32)   # [E_pad, Fh]
    hd = jnp.dot(a_dst, h_relu, preferred_element_type=jnp.float32)   # [E_pad, Fh]
    had = hs * hd                                                     # [E_pad, Fh]

    # scores[e] = sum_c had[e,c] * w_sum[c] + b_sum, written lane-dense.
    score = jax.lax.dot_general(
        wsum_ref[...], had, (((1,), (1,)), ((), ())),
        preferred_element_type=jnp.float32)                           # [8, E_pad]
    score_ref[...] = score + bsum_ref[...]


# -------------------------------------------------------------------------
# Glue
# -------------------------------------------------------------------------
def dense_scaled_laplacian(edge_index, num_nodes):
    """ChebConv 'sym' normalization with lambda_max=2: L_hat = -D^-1/2 A D^-1/2.

    Mirrors PyG: self-loops are removed before computing the degree and the
    normalized adjacency; the scaled Laplacian's diagonal ends up zero.
    PyG aggregates x[edge_index[0]] into edge_index[1] and computes the degree
    over edge_index[0], so dense L_hat[dst, src] = -deg^-1/2[src]*deg^-1/2[dst].
    Duplicate edges accumulate, exactly like scatter_add in PyG.
    """
    src = edge_index[0]
    dst = edge_index[1]
    keep = (src != dst).astype(jnp.float32)                   # remove_self_loops
    deg = jnp.zeros((num_nodes,), dtype=jnp.float32).at[src].add(keep)
    dinv = jnp.where(deg > 0, 1.0 / jnp.sqrt(jnp.maximum(deg, 1e-12)), 0.0)
    w = -dinv[src] * dinv[dst] * keep
    L = jnp.zeros((num_nodes, num_nodes), dtype=jnp.float32).at[dst, src].add(w)
    return L


def _vmem_spec():
    return pl.BlockSpec(memory_space=pltpu.MemorySpace.VMEM)


def init_params(key, in_channels, hidden, scale=0.1):
    ks = jax.random.split(key, 16)
    p = {}
    names_x = ["wxz", "wxr", "wxh"]
    names_h = ["whz", "whr", "whh"]
    for i, n in enumerate(names_x):
        p[n] = scale * jax.random.normal(ks[i], (2, in_channels, hidden), jnp.float32)
        p["b" + n[1:]] = scale * jax.random.normal(ks[3 + i], (1, hidden), jnp.float32)
    for i, n in enumerate(names_h):
        p[n] = scale * jax.random.normal(ks[6 + i], (2, hidden, hidden), jnp.float32)
        p["b" + n[1:]] = scale * jax.random.normal(ks[9 + i], (1, hidden), jnp.float32)
    p["wpost"] = scale * jax.random.normal(ks[12], (hidden, 2), jnp.float32)
    p["bpost"] = scale * jax.random.normal(ks[13], (1, 2), jnp.float32)
    return p


def icews_gconv_gru_forward(x, edge_index, edge_label_index, params, H=None,
                            matmul_dtype=jnp.bfloat16):
    """Returns (scores[E], hidden[N, Fh]).  matmul_dtype=jnp.float32 for exact f32."""
    N, Fi = x.shape
    Fh = params["wxz"].shape[-1]
    if H is None:
        H = jnp.zeros((N, Fh), dtype=jnp.float32)
    H = H.astype(jnp.float32)
    x = x.astype(jnp.float32)

    L = dense_scaled_laplacian(edge_index, N)

    # --- stack / pre-fold parameters (glue, done once per step) ------------
    # W_stack[k] : [Fi+Fh, 3*Fh], columns = (z | r | h-candidate).
    # The h-path block of the candidate columns is zero (that path uses H*R).
    wx_cat = jnp.concatenate([params["wxz"], params["wxr"], params["wxh"]], axis=-1)
    wh_cat = jnp.concatenate([params["whz"], params["whr"],
                              jnp.zeros_like(params["whz"])], axis=-1)
    w_stack = jnp.concatenate([wx_cat, wh_cat], axis=1)           # [2, Fi+Fh, 3Fh]
    bcat = jnp.concatenate([params["bxz"] + params["bhz"],
                            params["bxr"] + params["bhr"],
                            params["bxh"] + params["bhh"]], axis=-1)  # [1, 3Fh]
    whh = params["whh"]                                           # [2, Fh, Fh]

    # post-linear folded into a matvec (replicated over 8 sublanes so the
    # score matmul/store are fully tile-aligned; row 0 is used).
    wsum = jnp.sum(params["wpost"], axis=-1)                      # [Fh]
    wsum8 = jnp.tile(wsum[None, :], (8, 1)).astype(jnp.float32)   # [8, Fh]
    bsum = jnp.sum(params["bpost"]).reshape(1, 1).astype(jnp.float32)

    # lane-dense edge padding
    E = edge_label_index.shape[1]
    E_pad = max(((E + 127) // 128) * 128, 128)
    pad = E_pad - E
    src = jnp.pad(edge_label_index[0], (0, pad)).astype(jnp.int32).reshape(E_pad, 1)
    dst = jnp.pad(edge_label_index[1], (0, pad)).astype(jnp.int32).reshape(E_pad, 1)

    xh = jnp.concatenate([x, H], axis=-1)                         # [N, Fi+Fh]

    inputs = (
        xh.astype(matmul_dtype),          # xh_ref
        H,                                # h_ref (f32 gating path)
        L.astype(matmul_dtype),           # l_ref
        w_stack.astype(matmul_dtype),     # w_ref
        bcat.astype(jnp.float32),         # bcat_ref
        whh.astype(matmul_dtype),         # whh_ref
        src, dst,                         # src_ref, dst_ref
        wsum8, bsum,                      # wsum_ref, bsum_ref
    )

    h_new, score_mat = pl.pallas_call(
        fused_gconv_gru_link_kernel,
        out_shape=(jax.ShapeDtypeStruct((N, Fh), jnp.float32),
                   jax.ShapeDtypeStruct((8, E_pad), jnp.float32)),
        in_specs=[_vmem_spec()] * len(inputs),
        out_specs=(_vmem_spec(), _vmem_spec()),
    )(*inputs)

    scores = score_mat[0, :E]
    hidden = h_new          # pre-relu hidden state (torch: detached copy of h)
    return scores, hidden


if __name__ == "__main__":
    key = jax.random.PRNGKey(0)
    k_x, k_ei, k_eli, k_p = jax.random.split(key, 4)

    num_nodes = 16
    in_channels = 4
    hidden_conv_2 = 32
    num_edges = 24
    num_label_edges = 10

    x = jax.random.normal(k_x, (num_nodes, in_channels), jnp.float32)
    edge_index = jax.random.randint(k_ei, (2, num_edges), 0, num_nodes, jnp.int32)
    edge_label_index = jax.random.randint(
        k_eli, (2, num_label_edges), 0, num_nodes, jnp.int32)

    params = init_params(k_p, in_channels, hidden_conv_2)

    scores, hidden = icews_gconv_gru_forward(x, edge_index, edge_label_index, params)
    jax.block_until_ready((scores, hidden))

    assert scores.shape == (num_label_edges,)
    assert hidden.shape == (num_nodes, hidden_conv_2)
    assert bool(jnp.all(jnp.isfinite(scores))) and bool(jnp.all(jnp.isfinite(hidden)))
    # TODO(synk): BCEWithLogitsLoss (self.loss) is not part of forward; not implemented.
    print("KERNEL_OK")
</pallas_src>

<mosaic_0001>
module attributes {stable_mosaic.version = 11 : i64} {
  func.func @fused_gconv_gru_link_kernel(%arg0: memref<16x36xbf16, #tpu.memory_space<vmem>>, %arg1: memref<16x32xf32, #tpu.memory_space<vmem>>, %arg2: memref<16x16xbf16, #tpu.memory_space<vmem>>, %arg3: memref<2x36x96xbf16, #tpu.memory_space<vmem>>, %arg4: memref<1x96xf32, #tpu.memory_space<vmem>>, %arg5: memref<2x32x32xbf16, #tpu.memory_space<vmem>>, %arg6: memref<128x1xi32, #tpu.memory_space<vmem>>, %arg7: memref<128x1xi32, #tpu.memory_space<vmem>>, %arg8: memref<8x32xf32, #tpu.memory_space<vmem>>, %arg9: memref<1x1xf32, #tpu.memory_space<vmem>>, %arg10: memref<16x32xf32, #tpu.memory_space<vmem>>, %arg11: memref<8x128xf32, #tpu.memory_space<vmem>>) attributes {dimension_semantics = [], scalar_prefetch = 0 : i64, scratch_operands = 0 : i64, tpu.core_type = #tpu.core_type<tc>} {
    %c0 = arith.constant 0 : index
    %c0_0 = arith.constant 0 : index
    %0 = vector.load %arg0[%c0, %c0_0] : memref<16x36xbf16, #tpu.memory_space<vmem>>, vector<16x36xbf16>
    %c0_1 = arith.constant 0 : index
    %c0_2 = arith.constant 0 : index
    %1 = vector.load %arg1[%c0_1, %c0_2] : memref<16x32xf32, #tpu.memory_space<vmem>>, vector<16x32xf32>
    %c0_3 = arith.constant 0 : index
    %c0_4 = arith.constant 0 : index
    %2 = vector.load %arg2[%c0_3, %c0_4] : memref<16x16xbf16, #tpu.memory_space<vmem>>, vector<16x16xbf16>
    %cst = arith.constant dense<0.000000e+00> : vector<16x36xf32>
    %3 = tpu.matmul %2, %0, %cst {dimension_numbers = #tpu.dot_dimension_numbers<[1], [0], [0], [1], [0, 0, 1, 1], [], []>} : vector<16x16xbf16>, vector<16x36xbf16>, vector<16x36xf32> -> vector<16x36xf32>
    %c0_5 = arith.constant 0 : index
    %c0_6 = arith.constant 0 : index
    %c0_7 = arith.constant 0 : index
    %4 = vector.load %arg3[%c0_5, %c0_6, %c0_7] : memref<2x36x96xbf16, #tpu.memory_space<vmem>>, vector<1x36x96xbf16>
    %5 = vector.shape_cast %4 : vector<1x36x96xbf16> to vector<36x96xbf16>
    %cst_8 = arith.constant dense<0.000000e+00> : vector<16x96xf32>
    %6 = tpu.matmul %0, %5, %cst_8 {dimension_numbers = #tpu.dot_dimension_numbers<[1], [0], [0], [1], [0, 0, 1, 1], [], []>} : vector<16x36xbf16>, vector<36x96xbf16>, vector<16x96xf32> -> vector<16x96xf32>
    %7 = arith.truncf %3 : vector<16x36xf32> to vector<16x36xbf16>
    %c1 = arith.constant 1 : index
    %c0_9 = arith.constant 0 : index
    %c0_10 = arith.constant 0 : index
    %8 = vector.load %arg3[%c1, %c0_9, %c0_10] : memref<2x36x96xbf16, #tpu.memory_space<vmem>>, vector<1x36x96xbf16>
    %9 = vector.shape_cast %8 : vector<1x36x96xbf16> to vector<36x96xbf16>
    %cst_11 = arith.constant dense<0.000000e+00> : vector<16x96xf32>
    %10 = tpu.matmul %7, %9, %cst_11 {dimension_numbers = #tpu.dot_dimension_numbers<[1], [0], [0], [1], [0, 0, 1, 1], [], []>} : vector<16x36xbf16>, vector<36x96xbf16>, vector<16x96xf32> -> vector<16x96xf32>
    %11 = arith.addf %6, %10 : vector<16x96xf32>
    %c0_12 = arith.constant 0 : index
    %c0_13 = arith.constant 0 : index
    %12 = vector.load %arg4[%c0_12, %c0_13] : memref<1x96xf32, #tpu.memory_space<vmem>>, vector<1x96xf32>
    %13 = vector.broadcast %12 : vector<1x96xf32> to vector<16x96xf32>
    %14 = arith.addf %11, %13 : vector<16x96xf32>
    %15 = vector.extract_strided_slice %14 {offsets = [0, 0], sizes = [16, 32], strides = [1, 1]} : vector<16x96xf32> to vector<16x32xf32>
    %16 = arith.negf %15 : vector<16x32xf32>
    %17 = math.exp %16 : vector<16x32xf32>
    %cst_14 = arith.constant 1.000000e+00 : f32
    %18 = vector.broadcast %cst_14 : f32 to vector<16x32xf32>
    %19 = arith.addf %18, %17 : vector<16x32xf32>
    %20 = arith.divf %18, %19 : vector<16x32xf32>
    %21 = vector.extract_strided_slice %14 {offsets = [0, 32], sizes = [16, 32], strides = [1, 1]} : vector<16x96xf32> to vector<16x32xf32>
    %22 = arith.negf %21 : vector<16x32xf32>
    %23 = math.exp %22 : vector<16x32xf32>
    %cst_15 = arith.constant 1.000000e+00 : f32
    %24 = vector.broadcast %cst_15 : f32 to vector<16x32xf32>
    %25 = arith.addf %24, %23 : vector<16x32xf32>
    %26 = arith.divf %24, %25 : vector<16x32xf32>
    %27 = arith.mulf %1, %26 : vector<16x32xf32>
    %28 = arith.truncf %27 : vector<16x32xf32> to vector<16x32xbf16>
    %cst_16 = arith.constant dense<0.000000e+00> : vector<16x32xf32>
    %29 = tpu.matmul %2, %28, %cst_16 {dimension_numbers = #tpu.dot_dimension_numbers<[1], [0], [0], [1], [0, 0, 1, 1], [], []>} : vector<16x16xbf16>, vector<16x32xbf16>, vector<16x32xf32> -> vector<16x32xf32>
    %30 = vector.extract_strided_slice %14 {offsets = [0, 64], sizes = [16, 32], strides = [1, 1]} : vector<16x96xf32> to vector<16x32xf32>
    %c0_17 = arith.constant 0 : index
    %c0_18 = arith.constant 0 : index
    %c0_19 = arith.constant 0 : index
    %31 = vector.load %arg5[%c0_17, %c0_18, %c0_19] : memref<2x32x32xbf16, #tpu.memory_space<vmem>>, vector<1x32x32xbf16>
    %32 = vector.shape_cast %31 : vector<1x32x32xbf16> to vector<32x32xbf16>
    %cst_20 = arith.constant dense<0.000000e+00> : vector<16x32xf32>
    %33 = tpu.matmul %28, %32, %cst_20 {dimension_numbers = #tpu.dot_dimension_numbers<[1], [0], [0], [1], [0, 0, 1, 1], [], []>} : vector<16x32xbf16>, vector<32x32xbf16>, vector<16x32xf32> -> vector<16x32xf32>
    %34 = arith.addf %30, %33 : vector<16x32xf32>
    %35 = arith.truncf %29 : vector<16x32xf32> to vector<16x32xbf16>
    %c1_21 = arith.constant 1 : index
    %c0_22 = arith.constant 0 : index
    %c0_23 = arith.constant 0 : index
    %36 = vector.load %arg5[%c1_21, %c0_22, %c0_23] : memref<2x32x32xbf16, #tpu.memory_space<vmem>>, vector<1x32x32xbf16>
    %37 = vector.shape_cast %36 : vector<1x32x32xbf16> to vector<32x32xbf16>
    %cst_24 = arith.constant dense<0.000000e+00> : vector<16x32xf32>
    %38 = tpu.matmul %35, %37, %cst_24 {dimension_numbers = #tpu.dot_dimension_numbers<[1], [0], [0], [1], [0, 0, 1, 1], [], []>} : vector<16x32xbf16>, vector<32x32xbf16>, vector<16x32xf32> -> vector<16x32xf32>
    %39 = arith.addf %34, %38 : vector<16x32xf32>
    %40 = math.tanh %39 : vector<16x32xf32>
    %41 = arith.mulf %20, %1 : vector<16x32xf32>
    %cst_25 = arith.constant 1.000000e+00 : f32
    %42 = vector.broadcast %cst_25 : f32 to vector<16x32xf32>
    %43 = arith.subf %42, %20 : vector<16x32xf32>
    %44 = arith.mulf %43, %40 : vector<16x32xf32>
    %45 = arith.addf %41, %44 : vector<16x32xf32>
    %c0_26 = arith.constant 0 : index
    %c0_27 = arith.constant 0 : index
    %46 = vector.load %arg10[%c0_26, %c0_27] : memref<16x32xf32, #tpu.memory_space<vmem>>, vector<16x32xf32>
    tpu.vector_store %arg10[%c0_26, %c0_27], %45 {strides = array<i32>} : memref<16x32xf32, #tpu.memory_space<vmem>>, vector<16x32xf32>,
    %cst_28 = arith.constant 0.000000e+00 : f32
    %47 = vector.broadcast %cst_28 : f32 to vector<16x32xf32>
    %48 = arith.maximumf %45, %47 : vector<16x32xf32>
    %49 = tpu.iota {dimensions = array<i32: 1>} : vector<128x16xi32>
    %c0_29 = arith.constant 0 : index
    %c0_30 = arith.constant 0 : index
    %50 = vector.load %arg6[%c0_29, %c0_30] : memref<128x1xi32, #tpu.memory_space<vmem>>, vector<128x1xi32>
    %51 = vector.broadcast %50 : vector<128x1xi32> to vector<128x16xi32>
    %52 = arith.cmpi eq, %49, %51 : vector<128x16xi32>
    %53 = arith.extui %52 : vector<128x16xi1> to vector<128x16xi32>
    %54 = arith.sitofp %53 : vector<128x16xi32> to vector<128x16xf32>
    %c0_31 = arith.constant 0 : index
    %c0_32 = arith.constant 0 : index
    %55 = vector.load %arg7[%c0_31, %c0_32] : memref<128x1xi32, #tpu.memory_space<vmem>>, vector<128x1xi32>
    %56 = vector.broadcast %55 : vector<128x1xi32> to vector<128x16xi32>
    %57 = arith.cmpi eq, %49, %56 : vector<128x16xi32>
    %58 = arith.extui %57 : vector<128x16xi1> to vector<128x16xi32>
    %59 = arith.sitofp %58 : vector<128x16xi32> to vector<128x16xf32>
    %cst_33 = arith.constant dense<0.000000e+00> : vector<128x32xf32>
    %60 = tpu.matmul %54, %48, %cst_33 {dimension_numbers = #tpu.dot_dimension_numbers<[1], [0], [0], [1], [0, 0, 1, 1], [], []>} : vector<128x16xf32>, vector<16x32xf32>, vector<128x32xf32> -> vector<128x32xf32>
    %cst_34 = arith.constant dense<0.000000e+00> : vector<128x32xf32>
    %61 = tpu.matmul %59, %48, %cst_34 {dimension_numbers = #tpu.dot_dimension_numbers<[1], [0], [0], [1], [0, 0, 1, 1], [], []>} : vector<128x16xf32>, vector<16x32xf32>, vector<128x32xf32> -> vector<128x32xf32>
    %62 = arith.mulf %60, %61 : vector<128x32xf32>
    %c0_35 = arith.constant 0 : index
    %c0_36 = arith.constant 0 : index
    %63 = vector.load %arg8[%c0_35, %c0_36] : memref<8x32xf32, #tpu.memory_space<vmem>>, vector<8x32xf32>
    %cst_37 = arith.constant dense<0.000000e+00> : vector<8x128xf32>
    %64 = tpu.matmul %63, %62, %cst_37 {dimension_numbers = #tpu.dot_dimension_numbers<[1], [1], [0], [0], [0, 0, 1, 0], [], []>} : vector<8x32xf32>, vector<128x32xf32>, vector<8x128xf32> -> vector<8x128xf32>
    %c0_38 = arith.constant 0 : index
    %c0_39 = arith.constant 0 : index
    %65 = vector.load %arg9[%c0_38, %c0_39] : memref<1x1xf32, #tpu.memory_space<vmem>>, vector<1x1xf32>
    %66 = vector.broadcast %65 : vector<1x1xf32> to vector<8x128xf32>
    %67 = arith.addf %64, %66 : vector<8x128xf32>
    %c0_40 = arith.constant 0 : index
    %c0_41 = arith.constant 0 : index
    %68 = vector.load %arg11[%c0_40, %c0_41] : memref<8x128xf32, #tpu.memory_space<vmem>>, vector<8x128xf32>
    tpu.vector_store %arg11[%c0_40, %c0_41], %67 {strides = array<i32>} : memref<8x128xf32, #tpu.memory_space<vmem>>, vector<8x128xf32>,
    return
  }
}

</mosaic_0001>

<llo_original>
// kernel: tpu_custom_call.1
$region0: #{tpu_custom_call.1}
  #allocation0 [shape = 'u32[]', space=smem, size = 0x4, offset = 0x4, fixed_abs, tag = 'smem constant byte address 0x4 - core index']
  #allocation1 [shape = 'u32[72,128]{1,0:T(1,128)}', space=vmem, size = 0x9000, scoped, tag = 'internal scratch']
  #allocation2 [shape = 'f32[1,1]{1,0:T(1,128)S(1)}', space=vmem, size = 0x200, scoped, tag = 'scoped memory for tpu_custom_call.1']
  %s0 = inlined_call_operand.vmem [shape: bf16[16,36], index: 0, kind: input, shape index: {}]
  %s1 = inlined_call_operand.vmem [shape: f32[16,32], index: 1, kind: input, shape index: {}]
  %s2 = inlined_call_operand.vmem [shape: bf16[16,16], index: 2, kind: input, shape index: {}]
  %s3 = inlined_call_operand.vmem [shape: bf16[2,36,96], index: 3, kind: input, shape index: {}]
  %s4 = inlined_call_operand.vmem [shape: f32[1,96], index: 4, kind: input, shape index: {}]
  %s5 = inlined_call_operand.vmem [shape: bf16[2,32,32], index: 5, kind: input, shape index: {}]
  %s6 = inlined_call_operand.vmem [shape: s32[128,1], index: 6, kind: input, shape index: {}]
  %s7 = inlined_call_operand.vmem [shape: s32[128,1], index: 7, kind: input, shape index: {}]
  %s8 = inlined_call_operand.vmem [shape: f32[8,32], index: 8, kind: input, shape index: {}]
  %s9 = inlined_call_operand.<no memory space> [shape: f32[1,1], index: 9, kind: input, shape index: {}]
  %s10 = inlined_call_operand.hbm [shape: f32[16,32], index: 10, kind: output, shape index: {0}]
  %s11 = inlined_call_operand.hbm [shape: f32[8,128], index: 11, kind: output, shape index: {1}]
  %12 = xla_tuple %s10, %s11
  %s13 = sld [smem:[#allocation0]]
  $region58: #{tpu_custom_call.1} parent=0
    _
  %s15 = ssub.s32 1, %s13
  %s16 = scalar_select 0, %s15, %s13
  %v17 = vstv %s9
  %18 = vst [vmem:[#allocation2] sm:$0x1] %v17
  $region1: #{tpu_custom_call.1} parent=0
    #allocation3 [shape = 'u8[8192]{0}', space=vmem, size = 0x2000, scoped, tag = 'output window, operand 0, single buffered']
    #allocation4 [shape = 's32[1]{0}', space=sflag, size = 0x4, scoped, tag = 'scoped memory for tpu_custom_call.1']
    #allocation5 [shape = 'u8[4096]{0}', space=vmem, size = 0x1000, scoped, tag = 'output window, operand 1, single buffered']
    #allocation6 [shape = 's32[1]{0}', space=sflag, size = 0x4, scoped, tag = 'scoped memory for tpu_custom_call.1']
    %19 = vsyncpa [#allocation4], 0
    %20 = vsyncpa [#allocation6], 0
    // Predicated region
    $region2: #{tpu_custom_call.1} parent=1 // pred_check
      _
    $region3: #{tpu_custom_call.1} parent=1 // pred_check_branch
      %22 = sbr.rel (0) target = $region5
    $region4: #{tpu_custom_call.1} parent=1 // pred_region
      _
    $region5: #{tpu_custom_call.1} parent=1 // pred_fallthru
      _
    // Predicated region
    $region6: #{tpu_custom_call.1} parent=1 // pred_check
      _
    $region7: #{tpu_custom_call.1} parent=1 // pred_check_branch
      %24 = sbr.rel (0) target = $region9
    $region8: #{tpu_custom_call.1} parent=1 // pred_region
      _
    $region9: #{tpu_custom_call.1} parent=1 // pred_fallthru
      _
    // Predicated region
    $region10: #{tpu_custom_call.1} parent=1 // pred_check
      _
    $region11: #{tpu_custom_call.1} parent=1 // pred_check_branch
      %26 = sbr.rel (0) target = $region13
    $region12: #{tpu_custom_call.1} parent=1 // pred_region
      _
    $region13: #{tpu_custom_call.1} parent=1 // pred_fallthru
      _
    // Predicated region
    $region14: #{tpu_custom_call.1} parent=1 // pred_check
      _
    $region15: #{tpu_custom_call.1} parent=1 // pred_check_branch
      %28 = sbr.rel (0) target = $region17
    $region16: #{tpu_custom_call.1} parent=1 // pred_region
      _
    $region17: #{tpu_custom_call.1} parent=1 // pred_fallthru
      _
    // Predicated region
    $region18: #{tpu_custom_call.1} parent=1 // pred_check
      _
    $region19: #{tpu_custom_call.1} parent=1 // pred_check_branch
      %30 = sbr.rel (0) target = $region21
    $region20: #{tpu_custom_call.1} parent=1 // pred_region
      _
    $region21: #{tpu_custom_call.1} parent=1 // pred_fallthru
      _
    // Predicated region
    $region22: #{tpu_custom_call.1} parent=1 // pred_check
      _
    $region23: #{tpu_custom_call.1} parent=1 // pred_check_branch
      %32 = sbr.rel (0) target = $region25
    $region24: #{tpu_custom_call.1} parent=1 // pred_region
      _
    $region25: #{tpu_custom_call.1} parent=1 // pred_fallthru
      _
    // Predicated region
    $region26: #{tpu_custom_call.1} parent=1 // pred_check
      _
    $region27: #{tpu_custom_call.1} parent=1 // pred_check_branch
      %34 = sbr.rel (0) target = $region29
    $region28: #{tpu_custom_call.1} parent=1 // pred_region
      _
    $region29: #{tpu_custom_call.1} parent=1 // pred_fallthru
      _
    // Predicated region
    $region30: #{tpu_custom_call.1} parent=1 // pred_check
      _
    $region31: #{tpu_custom_call.1} parent=1 // pred_check_branch
      %36 = sbr.rel (0) target = $region33
    $region32: #{tpu_custom_call.1} parent=1 // pred_region
      _
    $region33: #{tpu_custom_call.1} parent=1 // pred_fallthru
      _
    // Predicated region
    $region34: #{tpu_custom_call.1} parent=1 // pred_check
      _
    $region35: #{tpu_custom_call.1} parent=1 // pred_check_branch
      %38 = sbr.rel (0) target = $region37
    $region36: #{tpu_custom_call.1} parent=1 // pred_region
      _
    $region37: #{tpu_custom_call.1} parent=1 // pred_fallthru
      _
    // Predicated region
    $region38: #{tpu_custom_call.1} parent=1 // pred_check
      _
    $region39: #{tpu_custom_call.1} parent=1 // pred_check_branch
      %40 = sbr.rel (0) target = $region41
    $region40: #{tpu_custom_call.1} parent=1 // pred_region
      _
    $region41: #{tpu_custom_call.1} parent=1 // pred_fallthru
      _
    %v42 = vld [vmem:[%s0] sm:$0xf]
    %v43 = vld [vmem:[%s0 + $0x4] sm:$0xf]
    %v44 = vld [vmem:[%s1] sm:$0xff]
    %v45 = vld [vmem:[%s1 + $0x8] sm:$0xff]
    %v46 = vld [vmem:[%s2] sm:$0xf]
    %v47 = vld [vmem:[%s2 + $0x4] sm:$0xf]
    %v50 = vunpack.c.l.b16 %v46
    %v51 = vunpack.c.l.b16 %v47
    %v52 = vpack.c.b16 %v51, %v50
    %v55 = vunpack.c.l.b16 %v42
    %v56 = vunpack.c.l.b16 %v43
    %v57 = vpack.c.b16 %v56, %v55
    %vm59 = vcmask 130048
    %v61 = vsel %vm59, %v52, 0
    %63 = vmatpush.bf16.msra.mxu0 0
    %64 = vmatpush.bf16.msra.mxu0 0
    %65 = vmatpush.bf16.msra.mxu0 0
    %66 = vmatpush.bf16.msra.mxu0 0
    %67 = vmatpush.bf16.msra.mxu0 0
    %68 = vmatpush.bf16.msra.mxu0 0
    %69 = vmatpush.bf16.msra.mxu0 0
    %70 = vmatpush.bf16.msra.mxu0 %v57
    %71 = vmatmul.bf16.gmra.mxu0 %v61
    %v72 = vpop.f32.mrf.mxu0
    %v73 = vadd.f32 0.0, %v72
    %v74 = vpop.f32.mrf.mxu0
    %v75 = vadd.f32 0.0, %v74
    %76 = vdwg.mxu0
    %v77 = vld [vmem:[%s3] sm:$0xf]
    %v78 = vld [vmem:[%s3 + $0x4] sm:$0xf]
    %v79 = vld [vmem:[%s3 + $0x8] sm:$0xf]
    %v80 = vld [vmem:[%s3 + $0xc] sm:$0xf]
    %v81 = vld [vmem:[%s3 + $0x10] sm:$0x3]
    %v82 = vpack.c.bf16 %v75, %v73
    %s83 = scalar_lea.vmem %s3, 20
    %v84 = vld [vmem:[%s83] sm:$0xf]
    %v85 = vld [vmem:[%s83 + $0x4] sm:$0xf]
    %v86 = vld [vmem:[%s83 + $0x8] sm:$0xf]
    %v87 = vld [vmem:[%s83 + $0xc] sm:$0xf]
    %v88 = vld [vmem:[%s83 + $0x10] sm:$0x3]
    %v94 = vunpack.c.l.b16 %v84
    %v95 = vunpack.c.l.b16 %v85
    %v96 = vunpack.c.l.b16 %v86
    %v97 = vunpack.c.l.b16 %v87
    %v98 = vunpack.c.l.b16 %v88
    %v99 = vpack.c.b16 %v95, %v94
    %v100 = vpack.c.b16 %v97, %v96
    %v101 = vpack.c.b16 %v98, %v98
    %vm104 = vcmask 293888
    %v106 = vsel %vm104, %v82, 0
    %vm108 = vcmask 1041408
    %v110 = vsel %vm108, %v101, 0
    %112 = vmatpush.bf16.msra.mxu0 0
    %113 = vmatpush.bf16.msra.mxu0 0
    %114 = vmatpush.bf16.msra.mxu0 0
    %115 = vmatpush.bf16.msra.mxu0 0
    %116 = vmatpush.bf16.msra.mxu0 0
    %117 = vmatpush.bf16.msra.mxu0 %v110
    %118 = vmatpush.bf16.msra.mxu0 %v100
    %119 = vmatpush.bf16.msra.mxu0 %v99
    %120 = vmatmul.bf16.gmra.mxu0 %v106
    %v121 = vpop.f32.mrf.mxu0
    %v122 = vadd.f32 0.0, %v121
    %v123 = vpop.f32.mrf.mxu0
    %v124 = vadd.f32 0.0, %v123
    %125 = vdwg.mxu0
    %v131 = vunpack.c.l.b16 %v77
    %v132 = vunpack.c.l.b16 %v78
    %v133 = vunpack.c.l.b16 %v79
    %v134 = vunpack.c.l.b16 %v80
    %v135 = vunpack.c.l.b16 %v81
    %v136 = vpack.c.b16 %v132, %v131
    %v137 = vpack.c.b16 %v134, %v133
    %v138 = vpack.c.b16 %v135, %v135
    %v142 = vsel %vm104, %v57, 0
    %v145 = vsel %vm108, %v138, 0
    %147 = vmatpush.bf16.msra.mxu0 0
    %148 = vmatpush.bf16.msra.mxu0 0
    %149 = vmatpush.bf16.msra.mxu0 0
    %150 = vmatpush.bf16.msra.mxu0 0
    %151 = vmatpush.bf16.msra.mxu0 0
    %152 = vmatpush.bf16.msra.mxu0 %v145
    %153 = vmatpush.bf16.msra.mxu0 %v137
    %154 = vmatpush.bf16.msra.mxu0 %v136
    %155 = vmatmul.bf16.gmra.mxu0 %v142
    %v156 = vpop.f32.mrf.mxu0
    %v157 = vadd.f32 %v122, %v156
    %v158 = vpop.f32.mrf.mxu0
    %v159 = vadd.f32 %v124, %v158
    %160 = vdwg.mxu0
    %v161 = vld [vmem:[%s4] sm:$0x1]
    %v163 = vperm.slane %v161, 0
    %v165 = vadd.f32 %v157, %v163
    %v166 = vadd.f32 %v159, %v163
    %v167 = vxor.u32 %v165, 2147483648
    %v168 = vxor.u32 %v166, 2147483648
    %v169 = vmul.f32 %v167, 1.442695
    %v170 = vpow.pop %v169
    %v171 = vmul.f32 %v168, 1.442695
    %v172 = vpow.pop %v171
    %v173 = vadd.f32 %v170, 1.0
    %v174 = vadd.f32 %v172, 1.0
    %v175 = vrcp.pop %v173
    %v176 = vmul.f32 %v173, %v175
    %v177 = vsub.f32 1.0, %v176
    %v178 = vmul.f32 %v175, %v177
    %v179 = vadd.f32 %v175, %v178
    %vm180 = vweird.f32 %v173
    %vm181 = vweird.f32 %v175
    %vm182 = vmor %vm180, %vm181
    %v183 = vsel %vm182, %v175, %v179
    %v184 = vand.u32 2147483647, %v173
    %vm185 = vcmp.eq.f32.partialorder %v184, 8.507059e+37
    %v186 = vand.u32 %v173, 2147483648
    %v187 = vor.u32 1.1754944e-38, %v186
    %v188 = vsel %vm185, %v187, %v183
    %v189 = vmul.f32 1.0, %v188
    %v190 = vrcp.pop %v174
    %v191 = vmul.f32 %v174, %v190
    %v192 = vsub.f32 1.0, %v191
    %v193 = vmul.f32 %v190, %v192
    %v194 = vadd.f32 %v190, %v193
    %vm195 = vweird.f32 %v174
    %vm196 = vweird.f32 %v190
    %vm197 = vmor %vm195, %vm196
    %v198 = vsel %vm197, %v190, %v194
    %v199 = vand.u32 2147483647, %v174
    %vm200 = vcmp.eq.f32.partialorder %v199, 8.507059e+37
    %v201 = vand.u32 %v174, 2147483648
    %v202 = vor.u32 1.1754944e-38, %v201
    %v203 = vsel %vm200, %v202, %v198
    %v204 = vmul.f32 1.0, %v203
    %207 = vrot.lane.b32.xlu0 %v189, 96
    %v208 = vpop.permute.xlu0 %207
    %209 = vrot.lane.b32.xlu0 %v204, 96
    %v210 = vpop.permute.xlu0 %209
    %v213 = vmul.f32 %v44, %v208
    %v214 = vmul.f32 %v45, %v210
    %v215 = vpack.c.bf16 %v214, %v213
    %216 = vmatpush.bf16.msra.mxu0 0
    %217 = vmatpush.bf16.msra.mxu0 0
    %218 = vmatpush.bf16.msra.mxu0 0
    %219 = vmatpush.bf16.msra.mxu0 0
    %220 = vmatpush.bf16.msra.mxu0 0
    %221 = vmatpush.bf16.msra.mxu0 0
    %222 = vmatpush.bf16.msra.mxu0 0
    %223 = vmatpush.bf16.msra.mxu0 %v215
    %224 = vmatmul.bf16.gmra.mxu0 %v61
    %v225 = vpop.f32.mrf.mxu0
    %v226 = vadd.f32 0.0, %v225
    %v227 = vpop.f32.mrf.mxu0
    %v228 = vadd.f32 0.0, %v227
    %229 = vdwg.mxu0
    %v230 = vld [vmem:[%s5] sm:$0xf]
    %v231 = vld [vmem:[%s5 + $0x4] sm:$0xf]
    %v232 = vld [vmem:[%s5 + $0x8] sm:$0xf]
    %v233 = vld [vmem:[%s5 + $0xc] sm:$0xf]
    %v238 = vunpack.c.l.b16 %v230
    %v239 = vunpack.c.l.b16 %v231
    %v240 = vunpack.c.l.b16 %v232
    %v241 = vunpack.c.l.b16 %v233
    %v242 = vpack.c.b16 %v239, %v238
    %v243 = vpack.c.b16 %v241, %v240
    %vm246 = vcmask 261120
    %v248 = vsel %vm246, %v215, 0
    %250 = vmatpush.bf16.msra.mxu0 0
    %251 = vmatpush.bf16.msra.mxu0 0
    %252 = vmatpush.bf16.msra.mxu0 0
    %253 = vmatpush.bf16.msra.mxu0 0
    %254 = vmatpush.bf16.msra.mxu0 0
    %255 = vmatpush.bf16.msra.mxu0 0
    %256 = vmatpush.bf16.msra.mxu0 %v243
    %257 = vmatpush.bf16.msra.mxu0 %v242
    %258 = vmatmul.bf16.gmra.mxu0 %v248
    %v259 = vpop.f32.mrf.mxu0
    %v260 = vadd.f32 0.0, %v259
    %v261 = vpop.f32.mrf.mxu0
    %v262 = vadd.f32 0.0, %v261
    %263 = vdwg.mxu0
    %266 = vrot.lane.b32.xlu0 %v260, 64
    %v267 = vpop.permute.xlu0 %266
    %268 = vrot.lane.b32.xlu0 %v262, 64
    %v269 = vpop.permute.xlu0 %268
    %v272 = vadd.f32 %v165, %v267
    %v273 = vadd.f32 %v166, %v269
    %v274 = vpack.c.bf16 %v228, %v226
    %s275 = scalar_lea.vmem %s5, 16
    %v276 = vld [vmem:[%s275] sm:$0xf]
    %v277 = vld [vmem:[%s275 + $0x4] sm:$0xf]
    %v278 = vld [vmem:[%s275 + $0x8] sm:$0xf]
    %v279 = vld [vmem:[%s275 + $0xc] sm:$0xf]
    %v284 = vunpack.c.l.b16 %v276
    %v285 = vunpack.c.l.b16 %v277
    %v286 = vunpack.c.l.b16 %v278
    %v287 = vunpack.c.l.b16 %v279
    %v288 = vpack.c.b16 %v285, %v284
    %v289 = vpack.c.b16 %v287, %v286
    %v293 = vsel %vm246, %v274, 0
    %295 = vmatpush.bf16.msra.mxu0 0
    %296 = vmatpush.bf16.msra.mxu0 0
    %297 = vmatpush.bf16.msra.mxu0 0
    %298 = vmatpush.bf16.msra.mxu0 0
    %299 = vmatpush.bf16.msra.mxu0 0
    %300 = vmatpush.bf16.msra.mxu0 0
    %301 = vmatpush.bf16.msra.mxu0 %v289
    %302 = vmatpush.bf16.msra.mxu0 %v288
    %303 = vmatmul.bf16.gmra.mxu0 %v293
    %v304 = vpop.f32.mrf.mxu0
    %v305 = vadd.f32 0.0, %v304
    %v306 = vpop.f32.mrf.mxu0
    %v307 = vadd.f32 0.0, %v306
    %308 = vdwg.mxu0
    %311 = vrot.lane.b32.xlu0 %v305, 64
    %v312 = vpop.permute.xlu0 %311
    %313 = vrot.lane.b32.xlu0 %v307, 64
    %v314 = vpop.permute.xlu0 %313
    %v317 = vadd.f32 %v272, %v312
    %v318 = vadd.f32 %v273, %v314
    %v319 = vtanh.pop %v317
    %v320 = vtanh.pop %v318
    %v321 = vmul.f32 %v189, %v44
    %v322 = vmul.f32 %v204, %v45
    %v323 = vsub.f32 1.0, %v189
    %v324 = vsub.f32 1.0, %v204
    %327 = vrot.lane.b32.xlu0 %v319, 64
    %v328 = vpop.permute.xlu0 %327
    %329 = vrot.lane.b32.xlu0 %v320, 64
    %v330 = vpop.permute.xlu0 %329
    %v333 = vmul.f32 %v323, %v328
    %v334 = vmul.f32 %v324, %v330
    %v335 = vadd.f32 %v321, %v333
    %v336 = vadd.f32 %v322, %v334
    %337 = vst.msk [vmem:[#allocation3] sm:$0xff] %vm246, %v335
    %338 = vst.msk [vmem:[#allocation3 + $0x8] sm:$0xff] %vm246, %v336
    %v339 = vmax.f32 %v335, 0.0
    %v340 = vmax.f32 %v336, 0.0
    %v341 = vlaneseq
    %v342 = vand.u32 %v341, 127
    %v343 = vld [vmem:[%s6] sm:$0xff]
    %v344 = vld [vmem:[%s6 + $0x8] sm:$0xff]
    %v345 = vld [vmem:[%s6 + $0x10] sm:$0xff]
    %v346 = vld [vmem:[%s6 + $0x18] sm:$0xff]
    %v347 = vld [vmem:[%s6 + $0x20] sm:$0xff]
    %v348 = vld [vmem:[%s6 + $0x28] sm:$0xff]
    %v349 = vld [vmem:[%s6 + $0x30] sm:$0xff]
    %v350 = vld [vmem:[%s6 + $0x38] sm:$0xff]
    %v351 = vld [vmem:[%s6 + $0x40] sm:$0xff]
    %v352 = vld [vmem:[%s6 + $0x48] sm:$0xff]
    %v353 = vld [vmem:[%s6 + $0x50] sm:$0xff]
    %v354 = vld [vmem:[%s6 + $0x58] sm:$0xff]
    %v355 = vld [vmem:[%s6 + $0x60] sm:$0xff]
    %v356 = vld [vmem:[%s6 + $0x68] sm:$0xff]
    %v357 = vld [vmem:[%s6 + $0x70] sm:$0xff]
    %v358 = vld [vmem:[%s6 + $0x78] sm:$0xff]
    %359 = vset.pattern.permute.xlu0 0
    %360 = vperm.xlu0 %359, %v343
    %v361 = vpop.permute.xlu0 %360
    %362 = vset.pattern.permute.xlu0 0
    %363 = vperm.xlu0 %362, %v344
    %v364 = vpop.permute.xlu0 %363
    %365 = vset.pattern.permute.xlu0 0
    %366 = vperm.xlu0 %365, %v345
    %v367 = vpop.permute.xlu0 %366
    %368 = vset.pattern.permute.xlu0 0
    %369 = vperm.xlu0 %368, %v346
    %v370 = vpop.permute.xlu0 %369
    %371 = vset.pattern.permute.xlu0 0
    %372 = vperm.xlu0 %371, %v347
    %v373 = vpop.permute.xlu0 %372
    %374 = vset.pattern.permute.xlu0 0
    %375 = vperm.xlu0 %374, %v348
    %v376 = vpop.permute.xlu0 %375
    %377 = vset.pattern.permute.xlu0 0
    %378 = vperm.xlu0 %377, %v349
    %v379 = vpop.permute.xlu0 %378
    %380 = vset.pattern.permute.xlu0 0
    %381 = vperm.xlu0 %380, %v350
    %v382 = vpop.permute.xlu0 %381
    %383 = vset.pattern.permute.xlu0 0
    %384 = vperm.xlu0 %383, %v351
    %v385 = vpop.permute.xlu0 %384
    %386 = vset.pattern.permute.xlu0 0
    %387 = vperm.xlu0 %386, %v352
    %v388 = vpop.permute.xlu0 %387
    %389 = vset.pattern.permute.xlu0 0
    %390 = vperm.xlu0 %389, %v353
    %v391 = vpop.permute.xlu0 %390
    %392 = vset.pattern.permute.xlu0 0
    %393 = vperm.xlu0 %392, %v354
    %v394 = vpop.permute.xlu0 %393
    %395 = vset.pattern.permute.xlu0 0
    %396 = vperm.xlu0 %395, %v355
    %v397 = vpop.permute.xlu0 %396
    %398 = vset.pattern.permute.xlu0 0
    %399 = vperm.xlu0 %398, %v356
    %v400 = vpop.permute.xlu0 %399
    %401 = vset.pattern.permute.xlu0 0
    %402 = vperm.xlu0 %401, %v357
    %v403 = vpop.permute.xlu0 %402
    %404 = vset.pattern.permute.xlu0 0
    %405 = vperm.xlu0 %404, %v358
    %v406 = vpop.permute.xlu0 %405
    %vm407 = vcmp.eq.s32.totalorder %v342, %v361
    %vm408 = vcmp.eq.s32.totalorder %v342, %v364
    %vm409 = vcmp.eq.s32.totalorder %v342, %v367
    %vm410 = vcmp.eq.s32.totalorder %v342, %v370
    %vm411 = vcmp.eq.s32.totalorder %v342, %v373
    %vm412 = vcmp.eq.s32.totalorder %v342, %v376
    %vm413 = vcmp.eq.s32.totalorder %v342, %v379
    %vm414 = vcmp.eq.s32.totalorder %v342, %v382
    %vm415 = vcmp.eq.s32.totalorder %v342, %v385
    %vm416 = vcmp.eq.s32.totalorder %v342, %v388
    %vm417 = vcmp.eq.s32.totalorder %v342, %v391
    %vm418 = vcmp.eq.s32.totalorder %v342, %v394
    %vm419 = vcmp.eq.s32.totalorder %v342, %v397
    %vm420 = vcmp.eq.s32.totalorder %v342, %v400
    %vm421 = vcmp.eq.s32.totalorder %v342, %v403
    %vm422 = vcmp.eq.s32.totalorder %v342, %v406
    %v423 = vsel %vm407, 1, 0
    %v424 = vsel %vm408, 1, 0
    %v425 = vsel %vm409, 1, 0
    %v426 = vsel %vm410, 1, 0
    %v427 = vsel %vm411, 1, 0
    %v428 = vsel %vm412, 1, 0
    %v429 = vsel %vm413, 1, 0
    %v430 = vsel %vm414, 1, 0
    %v431 = vsel %vm415, 1, 0
    %v432 = vsel %vm416, 1, 0
    %v433 = vsel %vm417, 1, 0
    %v434 = vsel %vm418, 1, 0
    %v435 = vsel %vm419, 1, 0
    %v436 = vsel %vm420, 1, 0
    %v437 = vsel %vm421, 1, 0
    %v438 = vsel %vm422, 1, 0
    %v439 = vcvt.s32.f32 %v423
    %v440 = vcvt.s32.f32 %v424
    %v441 = vcvt.s32.f32 %v425
    %v442 = vcvt.s32.f32 %v426
    %v443 = vcvt.s32.f32 %v427
    %v444 = vcvt.s32.f32 %v428
    %v445 = vcvt.s32.f32 %v429
    %v446 = vcvt.s32.f32 %v430
    %v447 = vcvt.s32.f32 %v431
    %v448 = vcvt.s32.f32 %v432
    %v449 = vcvt.s32.f32 %v433
    %v450 = vcvt.s32.f32 %v434
    %v451 = vcvt.s32.f32 %v435
    %v452 = vcvt.s32.f32 %v436
    %v453 = vcvt.s32.f32 %v437
    %v454 = vcvt.s32.f32 %v438
    %v455 = vld [vmem:[%s7] sm:$0xff]
    %v456 = vld [vmem:[%s7 + $0x8] sm:$0xff]
    %v457 = vld [vmem:[%s7 + $0x10] sm:$0xff]
    %v458 = vld [vmem:[%s7 + $0x18] sm:$0xff]
    %v459 = vld [vmem:[%s7 + $0x20] sm:$0xff]
    %v460 = vld [vmem:[%s7 + $0x28] sm:$0xff]
    %v461 = vld [vmem:[%s7 + $0x30] sm:$0xff]
    %v462 = vld [vmem:[%s7 + $0x38] sm:$0xff]
    %v463 = vld [vmem:[%s7 + $0x40] sm:$0xff]
    %v464 = vld [vmem:[%s7 + $0x48] sm:$0xff]
    %v465 = vld [vmem:[%s7 + $0x50] sm:$0xff]
    %v466 = vld [vmem:[%s7 + $0x58] sm:$0xff]
    %v467 = vld [vmem:[%s7 + $0x60] sm:$0xff]
    %v468 = vld [vmem:[%s7 + $0x68] sm:$0xff]
    %v469 = vld [vmem:[%s7 + $0x70] sm:$0xff]
    %v470 = vld [vmem:[%s7 + $0x78] sm:$0xff]
    %471 = vset.pattern.permute.xlu0 0
    %472 = vperm.xlu0 %471, %v455
    %v473 = vpop.permute.xlu0 %472
    %474 = vset.pattern.permute.xlu0 0
    %475 = vperm.xlu0 %474, %v456
    %v476 = vpop.permute.xlu0 %475
    %477 = vset.pattern.permute.xlu0 0
    %478 = vperm.xlu0 %477, %v457
    %v479 = vpop.permute.xlu0 %478
    %480 = vset.pattern.permute.xlu0 0
    %481 = vperm.xlu0 %480, %v458
    %v482 = vpop.permute.xlu0 %481
    %483 = vset.pattern.permute.xlu0 0
    %484 = vperm.xlu0 %483, %v459
    %v485 = vpop.permute.xlu0 %484
    %486 = vset.pattern.permute.xlu0 0
    %487 = vperm.xlu0 %486, %v460
    %v488 = vpop.permute.xlu0 %487
    %489 = vset.pattern.permute.xlu0 0
    %490 = vperm.xlu0 %489, %v461
    %v491 = vpop.permute.xlu0 %490
    %492 = vset.pattern.permute.xlu0 0
    %493 = vperm.xlu0 %492, %v462
    %v494 = vpop.permute.xlu0 %493
    %495 = vset.pattern.permute.xlu0 0
    %496 = vperm.xlu0 %495, %v463
    %v497 = vpop.permute.xlu0 %496
    %498 = vset.pattern.permute.xlu0 0
    %499 = vperm.xlu0 %498, %v464
    %v500 = vpop.permute.xlu0 %499
    %501 = vset.pattern.permute.xlu0 0
    %502 = vperm.xlu0 %501, %v465
    %v503 = vpop.permute.xlu0 %502
    %504 = vset.pattern.permute.xlu0 0
    %505 = vperm.xlu0 %504, %v466
    %v506 = vpop.permute.xlu0 %505
    %507 = vset.pattern.permute.xlu0 0
    %508 = vperm.xlu0 %507, %v467
    %v509 = vpop.permute.xlu0 %508
    %510 = vset.pattern.permute.xlu0 0
    %511 = vperm.xlu0 %510, %v468
    %v512 = vpop.permute.xlu0 %511
    %513 = vset.pattern.permute.xlu0 0
    %514 = vperm.xlu0 %513, %v469
    %v515 = vpop.permute.xlu0 %514
    %516 = vset.pattern.permute.xlu0 0
    %517 = vperm.xlu0 %516, %v470
    %v518 = vpop.permute.xlu0 %517
    %vm519 = vcmp.eq.s32.totalorder %v342, %v473
    %vm520 = vcmp.eq.s32.totalorder %v342, %v476
    %vm521 = vcmp.eq.s32.totalorder %v342, %v479
    %vm522 = vcmp.eq.s32.totalorder %v342, %v482
    %vm523 = vcmp.eq.s32.totalorder %v342, %v485
    %vm524 = vcmp.eq.s32.totalorder %v342, %v488
    %vm525 = vcmp.eq.s32.totalorder %v342, %v491
    %vm526 = vcmp.eq.s32.totalorder %v342, %v494
    %vm527 = vcmp.eq.s32.totalorder %v342, %v497
    %vm528 = vcmp.eq.s32.totalorder %v342, %v500
    %vm529 = vcmp.eq.s32.totalorder %v342, %v503
    %vm530 = vcmp.eq.s32.totalorder %v342, %v506
    %vm531 = vcmp.eq.s32.totalorder %v342, %v509
    %vm532 = vcmp.eq.s32.totalorder %v342, %v512
    %vm533 = vcmp.eq.s32.totalorder %v342, %v515
    %vm534 = vcmp.eq.s32.totalorder %v342, %v518
    %v535 = vsel %vm519, 1, 0
    %v536 = vsel %vm520, 1, 0
    %v537 = vsel %vm521, 1, 0
    %v538 = vsel %vm522, 1, 0
    %v539 = vsel %vm523, 1, 0
    %v540 = vsel %vm524, 1, 0
    %v541 = vsel %vm525, 1, 0
    %v542 = vsel %vm526, 1, 0
    %v543 = vsel %vm527, 1, 0
    %v544 = vsel %vm528, 1, 0
    %v545 = vsel %vm529, 1, 0
    %v546 = vsel %vm530, 1, 0
    %v547 = vsel %vm531, 1, 0
    %v548 = vsel %vm532, 1, 0
    %v549 = vsel %vm533, 1, 0
    %v550 = vsel %vm534, 1, 0
    %v551 = vcvt.s32.f32 %v535
    %v552 = vcvt.s32.f32 %v536
    %v553 = vcvt.s32.f32 %v537
    %v554 = vcvt.s32.f32 %v538
    %v555 = vcvt.s32.f32 %v539
    %v556 = vcvt.s32.f32 %v540
    %v557 = vcvt.s32.f32 %v541
    %v558 = vcvt.s32.f32 %v542
    %v559 = vcvt.s32.f32 %v543
    %v560 = vcvt.s32.f32 %v544
    %v561 = vcvt.s32.f32 %v545
    %v562 = vcvt.s32.f32 %v546
    %v563 = vcvt.s32.f32 %v547
    %v564 = vcvt.s32.f32 %v548
    %v565 = vcvt.s32.f32 %v549
    %v566 = vcvt.s32.f32 %v550
    %v568 = vsel %vm59, %v439, 0
    %v571 = vsel %vm59, %v440, 0
    %v574 = vsel %vm59, %v441, 0
    %v577 = vsel %vm59, %v442, 0
    %v580 = vsel %vm59, %v443, 0
    %v583 = vsel %vm59, %v444, 0
    %v586 = vsel %vm59, %v445, 0
    %v589 = vsel %vm59, %v446, 0
    %v592 = vsel %vm59, %v447, 0
    %v595 = vsel %vm59, %v448, 0
    %v598 = vsel %vm59, %v449, 0
    %v601 = vsel %vm59, %v450, 0
    %v604 = vsel %vm59, %v451, 0
    %v607 = vsel %vm59, %v452, 0
    %v610 = vsel %vm59, %v453, 0
    %v613 = vsel %vm59, %v454, 0
    %615 = vmatpush.msra.mxu0 0.0
    %616 = vmatpush.msra.mxu0 0.0
    %617 = vmatpush.msra.mxu0 0.0
    %618 = vmatpush.msra.mxu0 0.0
    %619 = vmatpush.msra.mxu0 0.0
    %620 = vmatpush.msra.mxu0 0.0
    %621 = vmatpush.msra.mxu0 0.0
    %622 = vmatpush.msra.mxu0 0.0
    %623 = vmatpush.msra.mxu0 0.0
    %624 = vmatpush.msra.mxu0 0.0
    %625 = vmatpush.msra.mxu0 0.0
    %626 = vmatpush.msra.mxu0 0.0
    %627 = vmatpush.msra.mxu0 0.0
    %628 = vmatpush.msra.mxu0 0.0
    %629 = vmatpush.msra.mxu0 %v340
    %630 = vmatpush.msra.mxu0 %v339
    %631 = vmatmul.f32.gmra.mxu0 %v568
    %v632 = vpop.f32.mrf.mxu0
    %v633 = vadd.f32 0.0, %v632
    %634 = vmatmul.f32.gmra.mxu0 %v571
    %v635 = vpop.f32.mrf.mxu0
    %v636 = vadd.f32 0.0, %v635
    %637 = vmatmul.f32.gmra.mxu0 %v574
    %v638 = vpop.f32.mrf.mxu0
    %v639 = vadd.f32 0.0, %v638
    %640 = vmatmul.f32.gmra.mxu0 %v577
    %v641 = vpop.f32.mrf.mxu0
    %v642 = vadd.f32 0.0, %v641
    %643 = vmatmul.f32.gmra.mxu0 %v580
    %v644 = vpop.f32.mrf.mxu0
    %v645 = vadd.f32 0.0, %v644
    %646 = vmatmul.f32.gmra.mxu0 %v583
    %v647 = vpop.f32.mrf.mxu0
    %v648 = vadd.f32 0.0, %v647
    %649 = vmatmul.f32.gmra.mxu0 %v586
    %v650 = vpop.f32.mrf.mxu0
    %v651 = vadd.f32 0.0, %v650
    %652 = vmatmul.f32.gmra.mxu0 %v589
    %v653 = vpop.f32.mrf.mxu0
    %v654 = vadd.f32 0.0, %v653
    %655 = vmatmul.f32.gmra.mxu0 %v592
    %v656 = vpop.f32.mrf.mxu0
    %v657 = vadd.f32 0.0, %v656
    %658 = vmatmul.f32.gmra.mxu0 %v595
    %v659 = vpop.f32.mrf.mxu0
    %v660 = vadd.f32 0.0, %v659
    %661 = vmatmul.f32.gmra.mxu0 %v598
    %v662 = vpop.f32.mrf.mxu0
    %v663 = vadd.f32 0.0, %v662
    %664 = vmatmul.f32.gmra.mxu0 %v601
    %v665 = vpop.f32.mrf.mxu0
    %v666 = vadd.f32 0.0, %v665
    %667 = vmatmul.f32.gmra.mxu0 %v604
    %v668 = vpop.f32.mrf.mxu0
    %v669 = vadd.f32 0.0, %v668
    %670 = vmatmul.f32.gmra.mxu0 %v607
    %v671 = vpop.f32.mrf.mxu0
    %v672 = vadd.f32 0.0, %v671
    %673 = vmatmul.f32.gmra.mxu0 %v610
    %v674 = vpop.f32.mrf.mxu0
    %v675 = vadd.f32 0.0, %v674
    %676 = vmatmul.f32.gmra.mxu0 %v613
    %v677 = vpop.f32.mrf.mxu0
    %v678 = vadd.f32 0.0, %v677
    %679 = vdwg.mxu0
    %v681 = vsel %vm59, %v551, 0
    %v684 = vsel %vm59, %v552, 0
    %v687 = vsel %vm59, %v553, 0
    %v690 = vsel %vm59, %v554, 0
    %v693 = vsel %vm59, %v555, 0
    %v696 = vsel %vm59, %v556, 0
    %v699 = vsel %vm59, %v557, 0
    %v702 = vsel %vm59, %v558, 0
    %v705 = vsel %vm59, %v559, 0
    %v708 = vsel %vm59, %v560, 0
    %v711 = vsel %vm59, %v561, 0
    %v714 = vsel %vm59, %v562, 0
    %v717 = vsel %vm59, %v563, 0
    %v720 = vsel %vm59, %v564, 0
    %v723 = vsel %vm59, %v565, 0
    %v726 = vsel %vm59, %v566, 0
    %728 = vmatpush.msra.mxu0 0.0
    %729 = vmatpush.msra.mxu0 0.0
    %730 = vmatpush.msra.mxu0 0.0
    %731 = vmatpush.msra.mxu0 0.0
    %732 = vmatpush.msra.mxu0 0.0
    %733 = vmatpush.msra.mxu0 0.0
    %734 = vmatpush.msra.mxu0 0.0
    %735 = vmatpush.msra.mxu0 0.0
    %736 = vmatpush.msra.mxu0 0.0
    %737 = vmatpush.msra.mxu0 0.0
    %738 = vmatpush.msra.mxu0 0.0
    %739 = vmatpush.msra.mxu0 0.0
    %740 = vmatpush.msra.mxu0 0.0
    %741 = vmatpush.msra.mxu0 0.0
    %742 = vmatpush.msra.mxu0 %v340
    %743 = vmatpush.msra.mxu0 %v339
    %744 = vmatmul.f32.gmra.mxu0 %v681
    %v745 = vpop.f32.mrf.mxu0
    %v746 = vadd.f32 0.0, %v745
    %747 = vmatmul.f32.gmra.mxu0 %v684
    %v748 = vpop.f32.mrf.mxu0
    %v749 = vadd.f32 0.0, %v748
    %750 = vmatmul.f32.gmra.mxu0 %v687
    %v751 = vpop.f32.mrf.mxu0
    %v752 = vadd.f32 0.0, %v751
    %753 = vmatmul.f32.gmra.mxu0 %v690
    %v754 = vpop.f32.mrf.mxu0
    %v755 = vadd.f32 0.0, %v754
    %756 = vmatmul.f32.gmra.mxu0 %v693
    %v757 = vpop.f32.mrf.mxu0
    %v758 = vadd.f32 0.0, %v757
    %759 = vmatmul.f32.gmra.mxu0 %v696
    %v760 = vpop.f32.mrf.mxu0
    %v761 = vadd.f32 0.0, %v760
    %762 = vmatmul.f32.gmra.mxu0 %v699
    %v763 = vpop.f32.mrf.mxu0
    %v764 = vadd.f32 0.0, %v763
    %765 = vmatmul.f32.gmra.mxu0 %v702
    %v766 = vpop.f32.mrf.mxu0
    %v767 = vadd.f32 0.0, %v766
    %768 = vmatmul.f32.gmra.mxu0 %v705
    %v769 = vpop.f32.mrf.mxu0
    %v770 = vadd.f32 0.0, %v769
    %771 = vmatmul.f32.gmra.mxu0 %v708
    %v772 = vpop.f32.mrf.mxu0
    %v773 = vadd.f32 0.0, %v772
    %774 = vmatmul.f32.gmra.mxu0 %v711
    %v775 = vpop.f32.mrf.mxu0
    %v776 = vadd.f32 0.0, %v775
    %777 = vmatmul.f32.gmra.mxu0 %v714
    %v778 = vpop.f32.mrf.mxu0
    %v779 = vadd.f32 0.0, %v778
    %780 = vmatmul.f32.gmra.mxu0 %v717
    %v781 = vpop.f32.mrf.mxu0
    %v782 = vadd.f32 0.0, %v781
    %783 = vmatmul.f32.gmra.mxu0 %v720
    %v784 = vpop.f32.mrf.mxu0
    %v785 = vadd.f32 0.0, %v784
    %786 = vmatmul.f32.gmra.mxu0 %v723
    %v787 = vpop.f32.mrf.mxu0
    %v788 = vadd.f32 0.0, %v787
    %789 = vmatmul.f32.gmra.mxu0 %v726
    %v790 = vpop.f32.mrf.mxu0
    %v791 = vadd.f32 0.0, %v790
    %792 = vdwg.mxu0
    %v793 = vmul.f32 %v633, %v746
    %v794 = vmul.f32 %v636, %v749
    %v795 = vmul.f32 %v639, %v752
    %v796 = vmul.f32 %v642, %v755
    %v797 = vmul.f32 %v645, %v758
    %v798 = vmul.f32 %v648, %v761
    %v799 = vmul.f32 %v651, %v764
    %v800 = vmul.f32 %v654, %v767
    %v801 = vmul.f32 %v657, %v770
    %v802 = vmul.f32 %v660, %v773
    %v803 = vmul.f32 %v663, %v776
    %v804 = vmul.f32 %v666, %v779
    %v805 = vmul.f32 %v669, %v782
    %v806 = vmul.f32 %v672, %v785
    %v807 = vmul.f32 %v675, %v788
    %v808 = vmul.f32 %v678, %v791
    %v809 = vld [vmem:[%s8] sm:$0xff]
    %v810 = vld [vmem:[#allocation2] sm:$0x1]
    %v812 = vperm.slane %v810, 0
    %813 = vset.pattern.permute.xlu0 0
    %814 = vperm.xlu0 %813, %v812
    %v815 = vpop.permute.xlu0 %814
    %v818 = vsel %vm246, %v809, 0
    %v821 = vsel %vm246, %v793, 0
    %v824 = vsel %vm246, %v794, 0
    %v827 = vsel %vm246, %v795, 0
    %v830 = vsel %vm246, %v796, 0
    %v833 = vsel %vm246, %v797, 0
    %v836 = vsel %vm246, %v798, 0
    %v839 = vsel %vm246, %v799, 0
    %v842 = vsel %vm246, %v800, 0
    %v845 = vsel %vm246, %v801, 0
    %v848 = vsel %vm246, %v802, 0
    %v851 = vsel %vm246, %v803, 0
    %v854 = vsel %vm246, %v804, 0
    %v857 = vsel %vm246, %v805, 0
    %v860 = vsel %vm246, %v806, 0
    %v863 = vsel %vm246, %v807, 0
    %v866 = vsel %vm246, %v808, 0
    %868 = vmatpush.xpose.msra.mxu0 %v866
    %869 = vmatpush.xpose.msra.mxu0 %v863
    %870 = vmatpush.xpose.msra.mxu0 %v860
    %871 = vmatpush.xpose.msra.mxu0 %v857
    %872 = vmatpush.xpose.msra.mxu0 %v854
    %873 = vmatpush.xpose.msra.mxu0 %v851
    %874 = vmatpush.xpose.msra.mxu0 %v848
    %875 = vmatpush.xpose.msra.mxu0 %v845
    %876 = vmatpush.xpose.msra.mxu0 %v842
    %877 = vmatpush.xpose.msra.mxu0 %v839
    %878 = vmatpush.xpose.msra.mxu0 %v836
    %879 = vmatpush.xpose.msra.mxu0 %v833
    %880 = vmatpush.xpose.msra.mxu0 %v830
    %881 = vmatpush.xpose.msra.mxu0 %v827
    %882 = vmatpush.xpose.msra.mxu0 %v824
    %883 = vmatpush.xpose.msra.mxu0 %v821
    %884 = vmatmul.f32.gmra.mxu0 %v818
    %v885 = vpop.f32.mrf.mxu0
    %v886 = vadd.f32 %v815, %v885
    %887 = vdwg.mxu0
    %888 = vst [vmem:[#allocation5] sm:$0xff] %v886
    // Predicated region
    $region42: #{tpu_custom_call.1} parent=1 // pred_check
      _
    $region43: #{tpu_custom_call.1} parent=1 // pred_check_branch
      %890 = sbr.rel (0) target = $region45
    $region44: #{tpu_custom_call.1} parent=1 // pred_region
      %892 = vsyncadd [#allocation4], 0
      %s893 = sshll.u32 [#allocation3], 4
      %s894 = int_to_ptr.vmem [resolvable:$true] %s893
      %s895 = sshll.u32 %s10, 4
      %s896 = int_to_ptr.hbm [resolvable:$true] %s895
      %901 = dma.vmem_to_hbm [thread:$0]  %s894, 256, %s896, [#allocation4], 128, 128, 8
    $region45: #{tpu_custom_call.1} parent=1 // pred_fallthru
      _
    // Predicated region
    $region46: #{tpu_custom_call.1} parent=1 // pred_check
      _
    $region47: #{tpu_custom_call.1} parent=1 // pred_check_branch
      %903 = sbr.rel (0) target = $region49
    $region48: #{tpu_custom_call.1} parent=1 // pred_region
      %905 = vsyncadd [#allocation6], 0
      %s907 = sshll.u32 [#allocation5], 4
      %s908 = int_to_ptr.vmem [resolvable:$true] %s907
      %s909 = sshll.u32 %s11, 4
      %s910 = int_to_ptr.hbm [resolvable:$true] %s909
      %912 = dma.vmem_to_hbm [thread:$0]  %s908, 128, %s910, [#allocation6]
    $region49: #{tpu_custom_call.1} parent=1 // pred_fallthru
      _
    // Predicated region
    $region50: #{tpu_custom_call.1} parent=1 // pred_check
      _
    $region51: #{tpu_custom_call.1} parent=1 // pred_check_branch
      %914 = sbr.rel (0) target = $region53
    $region52: #{tpu_custom_call.1} parent=1 // pred_region
      %916 = dma.done [#allocation4], 256
    $region53: #{tpu_custom_call.1} parent=1 // pred_fallthru
      _
    // Predicated region
    $region54: #{tpu_custom_call.1} parent=1 // pred_check
      _
    $region55: #{tpu_custom_call.1} parent=1 // pred_check_branch
      %918 = sbr.rel (0) target = $region57
    $region56: #{tpu_custom_call.1} parent=1 // pred_region
      %920 = dma.done [#allocation6], 128
    $region57: #{tpu_custom_call.1} parent=1 // pred_fallthru
      _
    %921 = vsyncpa [#allocation4], 1
    %922 = vsyncpa [#allocation6], 1

</llo_original>
